<compile_context>
chip_gen: v7x
topology: tpu7x:2x2x1
jax: 0.10.0
libtpu: 0.0.40
codegen_flags: <defaults>
</compile_context>

<pallas_src>
import jax
import jax.numpy as jnp
from jax.experimental import pallas as pl
from jax.experimental.pallas import tpu as pltpu


_ACC_CAP_BYTES = 256 * 1024      # max f32 accumulator tile (block_b * block_h * 4)
_MXU_K = 256                     # contraction size of one MXU pass (v6e/v7x)


def _round_up(x, m):
    return ((x + m - 1) // m) * m


def _row_mult(itemsize):
    # sublane multiple for the second-to-last dim, dtype-packing aware
    return {4: 8, 2: 16, 1: 32}.get(itemsize, 8)


# ----------------------------------------------------------------------------- kernels

def _join_fc_kernel(a_ref, w_ref, b_ref, o_ref):
    """relu(a @ w + b) with a = cat(x, m): single full-K dot, f32 epilogue."""
    acc = jnp.dot(a_ref[...], w_ref[...], preferred_element_type=jnp.float32)
    acc = acc + b_ref[...].astype(jnp.float32)
    o_ref[...] = jnp.maximum(acc, 0.0).astype(o_ref.dtype)


def _make_split_kernel(f1):
    """relu(x @ w[:F1] + m @ w[F1:] + b): static, sublane-aligned weight views."""

    def kernel(x_ref, m_ref, w_ref, b_ref, o_ref):
        acc = jnp.dot(x_ref[...], w_ref[:f1, :], preferred_element_type=jnp.float32)
        acc = acc + jnp.dot(m_ref[...], w_ref[f1:, :], preferred_element_type=jnp.float32)
        acc = acc + b_ref[...].astype(jnp.float32)
        o_ref[...] = jnp.maximum(acc, 0.0).astype(o_ref.dtype)

    return kernel


def _join_fc_kernel_ktiled(a_ref, w_ref, b_ref, o_ref, acc_ref):
    """K-tiled variant: f32 VMEM scratch accumulator, bias+ReLU at the last K step."""
    k = pl.program_id(2)

    @pl.when(k == 0)
    def _():
        acc_ref[...] = jnp.zeros_like(acc_ref)

    acc_ref[...] += jnp.dot(a_ref[...], w_ref[...], preferred_element_type=jnp.float32)

    @pl.when(k == pl.num_programs(2) - 1)
    def _():
        out = acc_ref[...] + b_ref[...].astype(jnp.float32)
        o_ref[...] = jnp.maximum(out, 0.0).astype(o_ref.dtype)


# ----------------------------------------------------------------------------- wrapper

def join_forward(x, m, w, b, *, block_b=None, block_h=None, block_k=None):
    """Join(mode='cat') + after_process (Linear + ReLU).

    x: (B, F1), m: (B, F2), w: (F1+F2, H), b: (H,) -> relu(cat(x, m) @ w + b): (B, H)
    """
    B, F1 = x.shape
    Bm, F2 = m.shape
    assert B == Bm, "batch dims of x and m must match"
    assert x.dtype == m.dtype, "x and m must share a dtype"
    Fin, H = w.shape
    assert Fin == F1 + F2, "weight rows must equal F1 + F2"

    in_sz = x.dtype.itemsize
    w_sz = w.dtype.itemsize
    b_sz = b.dtype.itemsize
    out_dtype = x.dtype
    out_sz = out_dtype.itemsize
    b2d = b.reshape(1, H)

    # ---- chip-aware VMEM budget, wired to the compiler --------------------------
    try:
        phys_vmem = int(pltpu.get_tpu_info().vmem_capacity_bytes)
    except Exception:  # unknown chip / interpret mode: assume the small (v7x) VMEM
        phys_vmem = 64 * 1024 * 1024
    budget = max(16 * 1024 * 1024, min(phys_vmem * 3 // 4, 100 * 1024 * 1024))

    # ---- tile selection: round-up tiles, lane-dense H, capped f32 accumulator ---
    rmult = _row_mult(in_sz)
    if block_b is None:
        block_b = B if B < rmult else min(128, _round_up(B, rmult))
    if block_h is None:
        block_h = H if H < 128 else min(512, _round_up(H, 128))
    # keep the f32 accumulator tile vreg-friendly; prefer shrinking block_b so
    # output stores stay lane-dense
    while block_b * block_h * 4 > _ACC_CAP_BYTES and block_b > rmult:
        block_b = max(rmult, _round_up(block_b // 2, rmult))
    while block_b * block_h * 4 > _ACC_CAP_BYTES and block_h > 128:
        block_h = max(128, _round_up(block_h // 2, 128))

    def _full_k_vmem(bb, bh):
        # every operand double-buffered by the BlockSpec pipeline (conservative)
        return 2 * (bb * Fin * in_sz + Fin * bh * w_sz + bh * b_sz + bb * bh * out_sz)

    def _ktiled_vmem(bk, bb, bh):
        return (2 * (bb * bk * in_sz + bk * bh * w_sz + bh * b_sz + bb * bh * out_sz)
                + bb * bh * 4)  # + live scratch accumulator

    sub_w = _row_mult(w_sz)
    use_split = (block_k is None
                 and F1 >= _MXU_K and F2 >= _MXU_K and F1 % sub_w == 0
                 and _full_k_vmem(block_b, block_h) <= budget)
    use_full_k = (block_k is None and not use_split
                  and _full_k_vmem(block_b, block_h) <= budget)

    a = None
    w_in = w
    nk = 1
    if not use_split:
        # One fused XLA concat in the wrapper; the kernel never does a lane-axis
        # concat and runs a single K = Fin dot.
        a = jnp.concatenate([x, m], axis=1)

    if not (use_split or use_full_k):
        # ---- K-tiled setup (may shrink block_h/block_b further) -----------------
        if block_k is None:
            block_k = min(_round_up(Fin, 128), 1024)
            while block_k > 128 and _ktiled_vmem(block_k, block_b, block_h) > budget:
                block_k = max(128, _round_up(block_k // 2, 128))
            while block_h > 128 and _ktiled_vmem(block_k, block_b, block_h) > budget:
                block_h = max(128, _round_up(block_h // 2, 128))
            while block_b > rmult and _ktiled_vmem(block_k, block_b, block_h) > budget:
                block_b = max(rmult, _round_up(block_b // 2, rmult))
        # zero-pad the contraction dim: partial K blocks must not feed garbage
        # into the accumulator (padded zeros contribute nothing).
        f_pad = _round_up(Fin, block_k)
        if f_pad != Fin:
            a = jnp.pad(a, ((0, 0), (0, f_pad - Fin)))
            w_in = jnp.pad(w, ((0, f_pad - Fin), (0, 0)))
        nk = f_pad // block_k

    nb = pl.cdiv(B, block_b)
    nh = pl.cdiv(H, block_h)

    # ---- adaptive grid order: keep the more expensive re-stream resident --------
    act_bytes = B * Fin * in_sz
    wgt_bytes = Fin * H * w_sz
    h_outer = (nh - 1) * act_bytes <= (nb - 1) * wgt_bytes
    if h_outer:                       # weight slab resident across the inner batch axis
        bix = lambda a0, a1: a1
        hix = lambda a0, a1: a0
        grid2 = (nh, nb)
    else:                             # activation tile resident across the inner H axis
        bix = lambda a0, a1: a0
        hix = lambda a0, a1: a1
        grid2 = (nb, nh)
    # On a 2-TC chip prefer sharding the H axis (disjoint weight slabs per core)
    # when weights dominate traffic; no-op on single-TC v5e/v6e.
    inner_sem = ("arbitrary" if (h_outer and nh >= 2 and wgt_bytes >= act_bytes)
                 else "parallel")

    cost = pl.CostEstimate(
        flops=2 * B * Fin * H,
        transcendentals=0,
        bytes_accessed=B * Fin * in_sz + Fin * H * w_sz + H * b_sz + B * H * out_sz)
    out_shape = jax.ShapeDtypeStruct((B, H), out_dtype)

    def _cparams(sems):
        return pltpu.CompilerParams(dimension_semantics=sems, vmem_limit_bytes=budget)

    if use_split:
        # Two >=256-K dots, one full weight ref (in-kernel static views), no concat.
        grid_spec = pltpu.PrefetchScalarGridSpec(
            num_scalar_prefetch=0,
            grid=grid2,
            in_specs=[
                pl.BlockSpec((block_b, F1), lambda a0, a1: (bix(a0, a1), 0)),
                pl.BlockSpec((block_b, F2), lambda a0, a1: (bix(a0, a1), 0)),
                pl.BlockSpec((Fin, block_h), lambda a0, a1: (0, hix(a0, a1))),
                pl.BlockSpec((1, block_h), lambda a0, a1: (0, hix(a0, a1))),
            ],
            out_specs=pl.BlockSpec((block_b, block_h),
                                   lambda a0, a1: (bix(a0, a1), hix(a0, a1))),
        )
        return pl.pallas_call(
            _make_split_kernel(F1), out_shape=out_shape, grid_spec=grid_spec,
            compiler_params=_cparams(("parallel", inner_sem)), cost_estimate=cost,
        )(x, m, w, b2d)

    if use_full_k:
        grid_spec = pltpu.PrefetchScalarGridSpec(
            num_scalar_prefetch=0,
            grid=grid2,
            in_specs=[
                pl.BlockSpec((block_b, Fin), lambda a0, a1: (bix(a0, a1), 0)),
                pl.BlockSpec((Fin, block_h), lambda a0, a1: (0, hix(a0, a1))),
                pl.BlockSpec((1, block_h), lambda a0, a1: (0, hix(a0, a1))),
            ],
            out_specs=pl.BlockSpec((block_b, block_h),
                                   lambda a0, a1: (bix(a0, a1), hix(a0, a1))),
        )
        return pl.pallas_call(
            _join_fc_kernel, out_shape=out_shape, grid_spec=grid_spec,
            compiler_params=_cparams(("parallel", inner_sem)), cost_estimate=cost,
        )(a, w, b2d)

    # K-tiled path (large Fin): K is the last, "arbitrary" grid axis.
    grid_spec = pltpu.PrefetchScalarGridSpec(
        num_scalar_prefetch=0,
        grid=grid2 + (nk,),
        in_specs=[
            pl.BlockSpec((block_b, block_k), lambda a0, a1, k: (bix(a0, a1), k)),
            pl.BlockSpec((block_k, block_h), lambda a0, a1, k: (k, hix(a0, a1))),
            pl.BlockSpec((1, block_h), lambda a0, a1, k: (0, hix(a0, a1))),
        ],
        out_specs=pl.BlockSpec((block_b, block_h),
                               lambda a0, a1, k: (bix(a0, a1), hix(a0, a1))),
        scratch_shapes=[pltpu.VMEM((block_b, block_h), jnp.float32)],
    )
    return pl.pallas_call(
        _join_fc_kernel_ktiled, out_shape=out_shape, grid_spec=grid_spec,
        compiler_params=_cparams(("parallel", inner_sem, "arbitrary")),
        cost_estimate=cost,
    )(a, w_in, b2d)


def join_reference(x, m, w, b):
    j = jnp.concatenate([x, m], axis=1)
    return jnp.maximum(j @ w + b, 0.0)


def _rand_grid_vals(key, shape, scale=0.25):
    # Integer-valued inputs scaled by a power of two: the matmul result is exact in
    # f32 regardless of the MXU's internal precision, so the check is tight but not
    # flaky across TPU generations.
    return jax.random.randint(key, shape, -3, 4).astype(jnp.float32) * scale


if __name__ == "__main__":
    key = jax.random.PRNGKey(0)
    k1, k2, k3, k4, k5, k6, k7, k8 = jax.random.split(key, 8)

    # 1) small, aligned shapes -> merged single-dot path (K = F1 + F2 = 64)
    B, F1, F2, H = 8, 32, 32, 128
    x = _rand_grid_vals(k1, (B, F1))
    m = _rand_grid_vals(k2, (B, F2))
    w = _rand_grid_vals(k3, (F1 + F2, H))
    b = _rand_grid_vals(k4, (H,))
    out = jax.block_until_ready(join_forward(x, m, w, b))
    ref = join_reference(x, m, w, b)
    assert out.shape == (B, H)
    assert jnp.allclose(out, ref, atol=1e-5, rtol=1e-5), "mismatch (merged path)"

    # 2) awkward, non-multiple shapes -> round-up tiles + Pallas edge masking
    B2, F1b, F2b, H2 = 12, 20, 44, 200
    x2 = _rand_grid_vals(k5, (B2, F1b))
    m2 = _rand_grid_vals(k6, (B2, F2b))
    w2 = _rand_grid_vals(k7, (F1b + F2b, H2))
    b2 = _rand_grid_vals(k8, (H2,))
    out2 = jax.block_until_ready(join_forward(x2, m2, w2, b2))
    ref2 = join_reference(x2, m2, w2, b2)
    assert out2.shape == (B2, H2)
    assert jnp.allclose(out2, ref2, atol=1e-5, rtol=1e-5), "mismatch (edge-masked path)"

    # 3) forced K-tiling (block_k = 128, Fin = 256) -> scratch-accumulator path
    B3, F1c, F2c, H3 = 16, 128, 128, 128
    kk = jax.random.split(k1, 4)
    x3 = _rand_grid_vals(kk[0], (B3, F1c))
    m3 = _rand_grid_vals(kk[1], (B3, F2c))
    w3 = _rand_grid_vals(kk[2], (F1c + F2c, H3))
    b3 = _rand_grid_vals(kk[3], (H3,))
    out3 = jax.block_until_ready(join_forward(x3, m3, w3, b3, block_k=128))
    ref3 = join_reference(x3, m3, w3, b3)
    assert jnp.allclose(out3, ref3, atol=1e-5, rtol=1e-5), "mismatch (K-tiled path)"

    print("KERNEL_OK")
</pallas_src>

<mosaic_0001>
module attributes {stable_mosaic.version = 11 : i64} {
  func.func @_join_fc_kernel(%arg0: i32, %arg1: i32, %arg2: memref<8x64xf32, #tpu.memory_space<vmem>>, %arg3: memref<64x128xf32, #tpu.memory_space<vmem>>, %arg4: memref<1x128xf32, #tpu.memory_space<vmem>>, %arg5: memref<8x128xf32, #tpu.memory_space<vmem>>) attributes {dimension_semantics = [#tpu.dimension_semantics<parallel>, #tpu.dimension_semantics<parallel>], iteration_bounds = array<i64: 1, 1>, scalar_prefetch = 0 : i64, scratch_operands = 0 : i64, tpu.core_type = #tpu.core_type<tc>, window_params = [{transform_indices = @transform_0, window_bounds = array<i64: 8, 64>}, {transform_indices = @transform_1, window_bounds = array<i64: 64, 128>}, {transform_indices = @transform_2, window_bounds = array<i64: 1, 128>}, {transform_indices = @transform_3, window_bounds = array<i64: 8, 128>}]} {
    %c0 = arith.constant 0 : index
    %c0_0 = arith.constant 0 : index
    %0 = vector.load %arg2[%c0, %c0_0] : memref<8x64xf32, #tpu.memory_space<vmem>>, vector<8x64xf32>
    %c0_1 = arith.constant 0 : index
    %c0_2 = arith.constant 0 : index
    %1 = vector.load %arg3[%c0_1, %c0_2] : memref<64x128xf32, #tpu.memory_space<vmem>>, vector<64x128xf32>
    %cst = arith.constant dense<0.000000e+00> : vector<8x128xf32>
    %2 = tpu.matmul %0, %1, %cst {dimension_numbers = #tpu.dot_dimension_numbers<[1], [0], [0], [1], [0, 0, 1, 1], [], []>} : vector<8x64xf32>, vector<64x128xf32>, vector<8x128xf32> -> vector<8x128xf32>
    %c0_3 = arith.constant 0 : index
    %c0_4 = arith.constant 0 : index
    %3 = vector.load %arg4[%c0_3, %c0_4] : memref<1x128xf32, #tpu.memory_space<vmem>>, vector<1x128xf32>
    %4 = vector.broadcast %3 : vector<1x128xf32> to vector<8x128xf32>
    %5 = arith.addf %2, %4 : vector<8x128xf32>
    %cst_5 = arith.constant 0.000000e+00 : f32
    %6 = vector.broadcast %cst_5 : f32 to vector<8x128xf32>
    %7 = arith.maximumf %5, %6 : vector<8x128xf32>
    %c0_6 = arith.constant 0 : index
    %c0_7 = arith.constant 0 : index
    %8 = vector.load %arg5[%c0_6, %c0_7] : memref<8x128xf32, #tpu.memory_space<vmem>>, vector<8x128xf32>
    tpu.vector_store %arg5[%c0_6, %c0_7], %7 {strides = array<i32>} : memref<8x128xf32, #tpu.memory_space<vmem>>, vector<8x128xf32>,
    return
  }
  func.func @transform_0(%arg0: i32, %arg1: i32) -> (i32, i32) {
    %c0_i32 = arith.constant 0 : i32
    %c0_i32_0 = arith.constant 0 : i32
    return %arg1, %c0_i32 : i32, i32
  }
  func.func @transform_1(%arg0: i32, %arg1: i32) -> (i32, i32) {
    %c0_i32 = arith.constant 0 : i32
    %c0_i32_0 = arith.constant 0 : i32
    return %c0_i32, %arg0 : i32, i32
  }
  func.func @transform_2(%arg0: i32, %arg1: i32) -> (i32, i32) {
    %c0_i32 = arith.constant 0 : i32
    %c0_i32_0 = arith.constant 0 : i32
    return %c0_i32, %arg0 : i32, i32
  }
  func.func @transform_3(%arg0: i32, %arg1: i32) -> (i32, i32) {
    %c0_i32 = arith.constant 0 : i32
    return %arg1, %arg0 : i32, i32
  }
}

</mosaic_0001>

<llo_original>
// kernel: tpu_custom_call.1
$region0: #{tpu_custom_call.1}
  #allocation0 [shape = 'u32[]', space=smem, size = 0x4, offset = 0x4, fixed_abs, tag = 'smem constant byte address 0x4 - core index']
  #allocation1 [shape = 'u32[144,128]{1,0:T(1,128)}', space=vmem, size = 0x12000, scoped, tag = 'internal scratch']
  %s0 = inlined_call_operand.hbm [shape: f32[8,64], index: 0, kind: input, shape index: {}]
  %s1 = inlined_call_operand.hbm [shape: f32[64,128], index: 1, kind: input, shape index: {}]
  %s2 = inlined_call_operand.vmem [shape: f32[1,128], index: 2, kind: input, shape index: {}]
  %s3 = inlined_call_operand.hbm [shape: f32[8,128], index: 3, kind: output, shape index: {}]
  %s4 = sld [smem:[#allocation0]]
  $region30: #{tpu_custom_call.1} parent=0
    _
  %s6 = ssub.s32 1, %s4
  %s7 = scalar_select 0, %s6, %s4
  $region1: #{tpu_custom_call.1} parent=0
    #allocation2 [shape = 'u8[4096]{0}', space=vmem, size = 0x1000, scoped, tag = 'input window, operand 0, single buffered']
    #allocation3 [shape = 's32[1]{0}', space=sflag, size = 0x4, scoped, tag = 'scoped memory for tpu_custom_call.1']
    #allocation4 [shape = 's32[1]{0}', space=sflag, size = 0x4, scoped, tag = 'scoped memory for tpu_custom_call.1']
    #allocation5 [shape = 'u8[32768]{0}', space=vmem, size = 0x8000, scoped, tag = 'input window, operand 1, single buffered']
    #allocation6 [shape = 's32[1]{0}', space=sflag, size = 0x4, scoped, tag = 'scoped memory for tpu_custom_call.1']
    #allocation7 [shape = 'u8[4096]{0}', space=vmem, size = 0x1000, scoped, tag = 'output window, operand 0, single buffered']
    %8 = vsyncpa [#allocation3], 0
    %9 = vsyncpa [#allocation6], 0
    %10 = vsyncpa [#allocation4], 0
    // Predicated region
    $region2: #{tpu_custom_call.1} parent=1 // pred_check
      _
    $region3: #{tpu_custom_call.1} parent=1 // pred_check_branch
      %12 = sbr.rel (0) target = $region5
    $region4: #{tpu_custom_call.1} parent=1 // pred_region
      %s14 = ssub.s32 128, 128
      %15 = vsyncadd [#allocation3], %s14
      %s17 = sshll.u32 [#allocation2], 4
      %s18 = int_to_ptr.vmem [resolvable:$true] %s17
      %20 = dma.hbm_to_vmem [thread:$0]  %s0, 128, %s18, [#allocation3]
    $region5: #{tpu_custom_call.1} parent=1 // pred_fallthru
      _
    // Predicated region
    $region6: #{tpu_custom_call.1} parent=1 // pred_check
      _
    $region7: #{tpu_custom_call.1} parent=1 // pred_check_branch
      %22 = sbr.rel (0) target = $region9
    $region8: #{tpu_custom_call.1} parent=1 // pred_region
      %s24 = ssub.s32 1024, 1024
      %25 = vsyncadd [#allocation6], %s24
      %s26 = sshll.u32 [#allocation5], 4
      %s27 = int_to_ptr.vmem [resolvable:$true] %s26
      %32 = dma.hbm_to_vmem [thread:$0]  %s1, 1024, %s27, [#allocation6], 128, 128, 8
    $region9: #{tpu_custom_call.1} parent=1 // pred_fallthru
      _
    // Predicated region
    $region10: #{tpu_custom_call.1} parent=1 // pred_check
      _
    $region11: #{tpu_custom_call.1} parent=1 // pred_check_branch
      %34 = sbr.rel (0) target = $region13
    $region12: #{tpu_custom_call.1} parent=1 // pred_region
      _
    $region13: #{tpu_custom_call.1} parent=1 // pred_fallthru
      _
    // Predicated region
    $region14: #{tpu_custom_call.1} parent=1 // pred_check
      _
    $region15: #{tpu_custom_call.1} parent=1 // pred_check_branch
      %36 = sbr.rel (0) target = $region17
    $region16: #{tpu_custom_call.1} parent=1 // pred_region
      %37 = dma.done [#allocation3], 128
    $region17: #{tpu_custom_call.1} parent=1 // pred_fallthru
      _
    // Predicated region
    $region18: #{tpu_custom_call.1} parent=1 // pred_check
      _
    $region19: #{tpu_custom_call.1} parent=1 // pred_check_branch
      %39 = sbr.rel (0) target = $region21
    $region20: #{tpu_custom_call.1} parent=1 // pred_region
      %40 = dma.done [#allocation6], 1024
    $region21: #{tpu_custom_call.1} parent=1 // pred_fallthru
      _
    %v41 = vld [vmem:[#allocation2] sm:$0xff]
    %v42 = vld [vmem:[#allocation5] sm:$0xff]
    %v43 = vld [vmem:[#allocation5 + $0x8] sm:$0xff]
    %v44 = vld [vmem:[#allocation5 + $0x10] sm:$0xff]
    %v45 = vld [vmem:[#allocation5 + $0x18] sm:$0xff]
    %v46 = vld [vmem:[#allocation5 + $0x20] sm:$0xff]
    %v47 = vld [vmem:[#allocation5 + $0x28] sm:$0xff]
    %v48 = vld [vmem:[#allocation5 + $0x30] sm:$0xff]
    %v49 = vld [vmem:[#allocation5 + $0x38] sm:$0xff]
    %v50 = vld [vmem:[%s2] sm:$0x1]
    %v52 = vlaneseq
    %v53 = vshrl.u32 %v52, 7
    %v54 = vsub.s32 0, %v53
    %v55 = vrot.slane %v50, %v54
    %vm57 = vcmask 523264
    %v59 = vsel %vm57, %v41, 0
    %61 = vmatprep.subr.mxu0 0.0
    %62 = vmatpush1.msra.mxu0 %v42
    %63 = vmatprep.subr.mxu0 0.0
    %64 = vmatpush1.msra.mxu0 %v43
    %65 = vmatprep.subr.mxu0 0.0
    %66 = vmatpush1.msra.mxu0 %v44
    %67 = vmatprep.subr.mxu0 0.0
    %68 = vmatpush1.msra.mxu0 %v45
    %69 = vmatprep.subr.mxu0 0.0
    %70 = vmatpush1.msra.mxu0 %v46
    %71 = vmatprep.subr.mxu0 0.0
    %72 = vmatpush1.msra.mxu0 %v47
    %73 = vmatprep.subr.mxu0 0.0
    %74 = vmatpush1.msra.mxu0 %v48
    %75 = vmatprep.subr.mxu0 0.0
    %76 = vmatpush1.msra.mxu0 %v49
    %77 = vmatprep.subr.mxu0 0.0
    %78 = vmatpush1.msra.mxu0 0.0
    %79 = vmatprep.subr.mxu0 0.0
    %80 = vmatpush1.msra.mxu0 0.0
    %81 = vmatprep.subr.mxu0 0.0
    %82 = vmatpush1.msra.mxu0 0.0
    %83 = vmatprep.subr.mxu0 0.0
    %84 = vmatpush1.msra.mxu0 0.0
    %85 = vmatprep.subr.mxu0 0.0
    %86 = vmatpush1.msra.mxu0 0.0
    %87 = vmatprep.subr.mxu0 0.0
    %88 = vmatpush1.msra.mxu0 0.0
    %89 = vmatprep.subr.mxu0 0.0
    %90 = vmatpush1.msra.mxu0 0.0
    %91 = vmatprep.subr.mxu0 0.0
    %92 = vmatpush1.msra.mxu0 0.0
    %93 = vmatprep.subr.mxu0 0.0
    %94 = vmatpush1.msra.mxu0 0.0
    %95 = vmatprep.subr.mxu0 0.0
    %96 = vmatpush1.msra.mxu0 0.0
    %97 = vmatprep.subr.mxu0 0.0
    %98 = vmatpush1.msra.mxu0 0.0
    %99 = vmatprep.subr.mxu0 0.0
    %100 = vmatpush1.msra.mxu0 0.0
    %101 = vmatprep.subr.mxu0 0.0
    %102 = vmatpush1.msra.mxu0 0.0
    %103 = vmatprep.subr.mxu0 0.0
    %104 = vmatpush1.msra.mxu0 0.0
    %105 = vmatprep.subr.mxu0 0.0
    %106 = vmatpush1.msra.mxu0 0.0
    %107 = vmatprep.subr.mxu0 0.0
    %108 = vmatpush1.msra.mxu0 0.0
    %109 = vmatprep.subr.mxu0 0.0
    %110 = vmatpush1.msra.mxu0 0.0
    %111 = vmatprep.subr.mxu0 0.0
    %112 = vmatpush1.msra.mxu0 0.0
    %113 = vmatprep.subr.mxu0 0.0
    %114 = vmatpush1.msra.mxu0 0.0
    %115 = vmatprep.subr.mxu0 0.0
    %116 = vmatpush1.msra.mxu0 0.0
    %117 = vmatprep.subr.mxu0 0.0
    %118 = vmatpush1.msra.mxu0 0.0
    %119 = vmatprep.subr.mxu0 0.0
    %120 = vmatpush1.msra.mxu0 0.0
    %121 = vmatprep.subr.mxu0 0.0
    %122 = vmatpush1.msra.mxu0 0.0
    %123 = vmatprep.subr.mxu0 0.0
    %124 = vmatpush1.msra.mxu0 0.0
    %125 = vmatprep.mubr.f32.mxu0 0.0
    %126 = vmatmul.mubr.f32.gmra.mrb[0].mxu0 %v59
    %v127 = vpop.f32.mrb[0].mxu0
    %v128 = vadd.f32 %v55, %v127
    %v129 = vpop.f32.mrb[0].mxu0
    %130 = vdwg.mxu0
    %v131 = vmax.f32 %v128, 0.0
    %132 = vst [vmem:[#allocation7] sm:$0xff] %v131
    // Predicated region
    $region22: #{tpu_custom_call.1} parent=1 // pred_check
      _
    $region23: #{tpu_custom_call.1} parent=1 // pred_check_branch
      %134 = sbr.rel (0) target = $region25
    $region24: #{tpu_custom_call.1} parent=1 // pred_region
      %s136 = ssub.s32 128, 128
      %137 = vsyncadd [#allocation4], %s136
      %s139 = sshll.u32 [#allocation7], 4
      %s140 = int_to_ptr.vmem [resolvable:$true] %s139
      %142 = dma.vmem_to_hbm [thread:$0]  %s140, 128, %s3, [#allocation4]
    $region25: #{tpu_custom_call.1} parent=1 // pred_fallthru
      _
    // Predicated region
    $region26: #{tpu_custom_call.1} parent=1 // pred_check
      _
    $region27: #{tpu_custom_call.1} parent=1 // pred_check_branch
      %144 = sbr.rel (0) target = $region29
    $region28: #{tpu_custom_call.1} parent=1 // pred_region
      %145 = dma.done [#allocation4], 128
    $region29: #{tpu_custom_call.1} parent=1 // pred_fallthru
      _
    %146 = vsyncpa [#allocation3], 1
    %147 = vsyncpa [#allocation6], 1
    %148 = vsyncpa [#allocation4], 1

</llo_original>
